<compile_context>
chip_gen: v5e
topology: v5e:2x2
jax: 0.10.0
libtpu: 0.0.40
codegen_flags: <defaults>
</compile_context>

<pallas_src>
import functools

import jax
import jax.numpy as jnp
from jax.experimental import pallas as pl
from jax.experimental.pallas import tpu as pltpu


_SINGLE_BLOCK_MAX_BATCH = 256   # <= this: one un-gridded block (launch-bound)
_LANE = 128
_DEFAULT_TILE_B = 4096          # rows per grid step (lanes); multiple of 128


def _cdiv(a, b):
    return -(-a // b)


def _round_up(a, b):
    return _cdiv(a, b) * b


# --------------------------------------------------------------------------
# Activations (match Autoencoder.__activation_function)
# --------------------------------------------------------------------------
def _apply_activation(y, act):
    if act == "linear":
        return y
    if act == "relu":
        return jnp.maximum(y, 0.0)
    if act == "sigmoid":
        return jax.nn.sigmoid(y)
    if act == "tanh":
        return jnp.tanh(y)
    if act == "elu":
        # expm1 avoids cancellation; clamp so the unselected branch is finite.
        return jnp.where(y > 0.0, y, jnp.expm1(jnp.minimum(y, 0.0)))
    # TODO(synk): 'rrelu', 'param_relu', 'param_sigmoid' (randomized / learned
    # alpha activations) are not implemented in this synthetic kernel.
    raise NotImplementedError(act)


# --------------------------------------------------------------------------
# Fused kernel: the whole MLP in one body, transposed (feature x batch) layout.
# refs = (xT, w0, b0, w1, b1, ..., oT)
#   xT : (d_in, tile_b)     batch on lanes
#   wk : (out_k, in_k)      PyTorch nn.Linear layout (bf16 by default)
#   bk : (out_k, 1)         f32, broadcasts along lanes
#   oT : (d_out, tile_b)    lane-dense stores
# --------------------------------------------------------------------------
def _mlp_kernel(*refs, activations, mxu_dtype, layer0_vpu,
                tile_b, total_b, mask_tail):
    n_layers = len(activations)
    x_ref = refs[0]
    o_ref = refs[1 + 2 * n_layers]

    h = x_ref[...].astype(jnp.float32)              # (d_in, tile_b)
    if mask_tail:
        # Ragged last block: zero out-of-range lanes so stale VMEM garbage
        # never reaches exp/tanh (those lanes are dropped by write masking
        # anyway; this is one VPU cmp+select of paranoia).
        i = pl.program_id(0)
        lane = jax.lax.broadcasted_iota(jnp.int32, h.shape, 1)
        h = jnp.where(lane < (total_b - i * tile_b), h, 0.0)

    for k in range(n_layers):
        w_ref = refs[1 + 2 * k]
        b_ref = refs[2 + 2 * k]
        if k == 0 and layer0_vpu:
            # Fan-in <= 8: the MXU would be <2% utilized; do layer 0 as a few
            # broadcast-FMAs on the VPU (f32 math -> native on v5e as well).
            w = w_ref[...].astype(jnp.float32)      # (d0, d_in)
            y = w[:, 0:1] * h[0:1, :]
            for c in range(1, w.shape[1]):
                y = y + w[:, c:c + 1] * h[c:c + 1, :]
        else:
            # MXU: operands in mxu_dtype (bf16 default -> single-pass), f32 acc.
            y = jnp.dot(w_ref[...].astype(mxu_dtype), h.astype(mxu_dtype),
                        preferred_element_type=jnp.float32)
        y = y + b_ref[...].astype(jnp.float32)      # (d_out,1) -> lane broadcast
        h = _apply_activation(y, activations[k])    # stays f32 (v5e VPU/EUP)

    o_ref[...] = h.astype(o_ref.dtype)


# --------------------------------------------------------------------------
# Wrapper (jitted; specs/kernel are built once per shape & cached by jit).
# --------------------------------------------------------------------------
@functools.partial(jax.jit, static_argnames=("activations", "tile_b"))
def parameter_mlp_forward(x, weights, biases, *, activations,
                          tile_b=_DEFAULT_TILE_B):
    """Forward of Parameter.param: x (batch, n_mus) -> (batch, layers_mu[-1]).

    weights[k]: (out_k, in_k)  (PyTorch nn.Linear layout), biases[k]: (out_k,).
    """
    batch, d_in = x.shape
    n_layers = len(weights)
    assert n_layers == len(biases) == len(activations)
    assert weights[0].shape[1] == d_in
    d_out = weights[-1].shape[0]

    mxu_dtype = weights[0].dtype          # bf16 by default (see ParameterMLP)
    layer0_vpu = d_in <= 8

    # Transposed layout: batch on lanes. The transpose (+ cast to the MXU
    # operand dtype) is a single fused XLA copy.
    xt = x.T.astype(mxu_dtype)            # (d_in, batch)

    wb_args, wb_specs = [], []
    for w, b in zip(weights, biases):
        b2 = b.reshape(-1, 1).astype(jnp.float32)
        wb_args += [w, b2]
        # Weights / biases stay resident in VMEM across the whole grid.
        wb_specs += [pl.BlockSpec(w.shape, lambda i: (0, 0)),
                     pl.BlockSpec(b2.shape, lambda i: (0, 0))]

    kernel_kwargs = dict(activations=tuple(activations), mxu_dtype=mxu_dtype,
                         layer0_vpu=layer0_vpu)

    # Advisory cost estimate (logical batch only).
    flops = (2 * batch * sum(w.shape[0] * w.shape[1] for w in weights)
             + batch * sum(w.shape[0] for w in weights))
    transcendentals = batch * sum(
        w.shape[0] for w, act in zip(weights, activations)
        if act in ("sigmoid", "tanh", "elu"))
    bytes_accessed = (xt.size * xt.dtype.itemsize
                      + sum(w.size * w.dtype.itemsize for w in weights)
                      + sum(b.size * 4 for b in biases)
                      + batch * d_out * x.dtype.itemsize)
    cost = pl.CostEstimate(flops=int(flops),
                           transcendentals=int(transcendentals),
                           bytes_accessed=int(bytes_accessed))

    if batch <= _SINGLE_BLOCK_MAX_BATCH:
        # Single full-array block, no grid: no pipeline prologue/epilogue for a
        # launch-overhead-bound size.
        # TODO(synk): below ~256 rows a plain XLA dot would avoid the custom-
        # call launch entirely; kept on the Pallas path here by design.
        kernel = functools.partial(_mlp_kernel, tile_b=batch, total_b=batch,
                                   mask_tail=False, **kernel_kwargs)
        out_t = pl.pallas_call(
            kernel,
            out_shape=jax.ShapeDtypeStruct((d_out, batch), x.dtype),
            cost_estimate=cost,
        )(xt, *wb_args)
        return out_t.T

    # ------------- grid over batch tiles (batch on lanes) -------------
    # Tile: multiple of 128, capped so there are >= 2 grid steps whenever
    # batch allows (lets "parallel" shard over v7x's 2 TCs). VMEM per step at
    # tile=4096 is only a few MiB -- far under every chip's scoped limit.
    tile = max(_LANE, min(_round_up(tile_b, _LANE),
                          _round_up(_cdiv(batch, 2), _LANE)))
    grid_b = _cdiv(batch, tile)
    mask_tail = (batch % tile) != 0

    kernel = functools.partial(_mlp_kernel, tile_b=tile, total_b=batch,
                               mask_tail=mask_tail, **kernel_kwargs)

    in_specs = [pl.BlockSpec((d_in, tile), lambda i: (0, i))] + wb_specs
    out_t = pl.pallas_call(
        kernel,
        out_shape=jax.ShapeDtypeStruct((d_out, batch), x.dtype),
        grid=(grid_b,),
        in_specs=in_specs,
        out_specs=pl.BlockSpec((d_out, tile), lambda i: (0, i)),
        compiler_params=pltpu.CompilerParams(
            dimension_semantics=("parallel",),        # 2 TCs on v7x; no-op else
            vmem_limit_bytes=32 * 1024 * 1024,
        ),
        cost_estimate=cost,
    )(xt, *wb_args)
    return out_t.T


# --------------------------------------------------------------------------
# The Parameter module: MLP over layers_mu, act_hid on hidden layers,
# act_code on the final layer (matching Parameter.build / layersLoop).
# --------------------------------------------------------------------------
class ParameterMLP:
    def __init__(self, layers_mu, act_hid="relu", act_code="linear",
                 initialisation="xavier_normal", key=None,
                 param_dtype=jnp.bfloat16):
        self.layers_mu = list(layers_mu)
        steps_mu = len(self.layers_mu) - 1
        self.activations = tuple([act_hid] * (steps_mu - 1) + [act_code])

        if key is None:
            key = jax.random.PRNGKey(0)
        self.weights, self.biases = [], []
        for k in range(steps_mu):
            fan_in, fan_out = self.layers_mu[k], self.layers_mu[k + 1]
            key, wkey = jax.random.split(key)
            if initialisation == "zeros":
                w = jnp.zeros((fan_out, fan_in), jnp.float32)
            else:
                # xavier_normal (default).
                # TODO(synk): xavier_uniform / kaiming_* / sparse inits fall
                # back to xavier_normal in this synthetic kernel.
                std = (2.0 / (fan_in + fan_out)) ** 0.5
                w = std * jax.random.normal(wkey, (fan_out, fan_in), jnp.float32)
            # (out, in) layout (= PyTorch nn.Linear.weight), stored in the MXU
            # operand dtype (bf16 default: single-pass MXU, half the HBM/VMEM
            # bytes; accumulation stays f32 in the kernel).
            self.weights.append(w.astype(param_dtype))
            self.biases.append(jnp.zeros((fan_out,), jnp.float32))   # bias := 0

    def __call__(self, x, tile_b=_DEFAULT_TILE_B):
        return parameter_mlp_forward(x, self.weights, self.biases,
                                     activations=self.activations,
                                     tile_b=tile_b)


# --------------------------------------------------------------------------
# Pure-JAX reference with the same precision policy as the kernel:
# matmul operands rounded to the stored weight dtype, f32 accumulation,
# bias add + activations in f32.
# --------------------------------------------------------------------------
def _ref_act(y, act):
    if act == "linear":
        return y
    if act == "relu":
        return jnp.maximum(y, 0.0)
    if act == "sigmoid":
        return jax.nn.sigmoid(y)
    if act == "tanh":
        return jnp.tanh(y)
    if act == "elu":
        return jax.nn.elu(y)
    raise NotImplementedError(act)


def _ref_forward(x, weights, biases, activations):
    op_dtype = weights[0].dtype
    h = x.astype(jnp.float32)
    for w, b, act in zip(weights, biases, activations):
        lhs = h.astype(op_dtype).astype(jnp.float32)          # operand rounding
        wf = w.astype(jnp.float32)                            # (out, in)
        h = jnp.dot(lhs, wf.T, precision=jax.lax.Precision.HIGHEST)
        h = h + b.astype(jnp.float32).reshape(1, -1)
        h = _ref_act(h, act)
    return h.astype(x.dtype)


if __name__ == "__main__":
    # Shapes consistent with the module: n_mus = 4 input parameters,
    # layers_mu = [4, 32, 32, 8] -> two hidden layers (act_hid) + code layer.
    n_mus = 4
    layers_mu = [n_mus, 32, 32, 8]

    key = jax.random.PRNGKey(0)
    key, xkey, mkey = jax.random.split(key, 3)
    x = jax.random.normal(xkey, (8, n_mus), jnp.float32)

    # Case 1: relu / linear, small batch -> single-block (no-grid) path, bf16 MXU.
    model = ParameterMLP(layers_mu, act_hid="relu", act_code="linear",
                         initialisation="xavier_normal", key=mkey)
    out = jax.block_until_ready(model(x))
    assert out.shape == (8, layers_mu[-1]), out.shape
    ref = _ref_forward(x, model.weights, model.biases, model.activations)
    assert jnp.allclose(out, ref, atol=5e-5, rtol=5e-5)

    # Case 2: exercise sigmoid / tanh / elu activation paths.
    for act_hid, act_code in [("tanh", "sigmoid"), ("elu", "tanh")]:
        m2 = ParameterMLP(layers_mu, act_hid=act_hid, act_code=act_code, key=mkey)
        o2 = jax.block_until_ready(m2(x))
        r2 = _ref_forward(x, m2.weights, m2.biases, m2.activations)
        assert jnp.allclose(o2, r2, atol=5e-5, rtol=5e-5), (act_hid, act_code)

    # Case 3: grid path with a ragged last tile (640 rows, tile 256 -> 3 steps,
    # weights resident in VMEM, lane-dense output stores, no host pad/slice).
    key, xkey2 = jax.random.split(key)
    xb = jax.random.normal(xkey2, (640, n_mus), jnp.float32)
    ob = jax.block_until_ready(model(xb, tile_b=256))
    assert ob.shape == (640, layers_mu[-1]), ob.shape
    rb = _ref_forward(xb, model.weights, model.biases, model.activations)
    assert jnp.allclose(ob, rb, atol=5e-5, rtol=5e-5)

    # Case 4: pure-f32 parameter path (param_dtype override).
    m3 = ParameterMLP(layers_mu, act_hid="relu", act_code="linear", key=mkey,
                      param_dtype=jnp.float32)
    o3 = jax.block_until_ready(m3(x))
    r3 = _ref_forward(x, m3.weights, m3.biases, m3.activations)
    assert jnp.allclose(o3, r3, atol=5e-5, rtol=5e-5)

    print("KERNEL_OK")
</pallas_src>

<mosaic_0001>
module attributes {stable_mosaic.version = 11 : i64} {
  func.func @_mlp_kernel(%arg0: memref<4x8xbf16, #tpu.memory_space<vmem>>, %arg1: memref<32x4xbf16, #tpu.memory_space<vmem>>, %arg2: memref<32x1xf32, #tpu.memory_space<vmem>>, %arg3: memref<32x32xbf16, #tpu.memory_space<vmem>>, %arg4: memref<32x1xf32, #tpu.memory_space<vmem>>, %arg5: memref<8x32xbf16, #tpu.memory_space<vmem>>, %arg6: memref<8x1xf32, #tpu.memory_space<vmem>>, %arg7: memref<8x8xf32, #tpu.memory_space<vmem>>) attributes {dimension_semantics = [], scalar_prefetch = 0 : i64, scratch_operands = 0 : i64, tpu.core_type = #tpu.core_type<tc>} {
    %c0 = arith.constant 0 : index
    %c0_0 = arith.constant 0 : index
    %0 = vector.load %arg0[%c0, %c0_0] : memref<4x8xbf16, #tpu.memory_space<vmem>>, vector<4x8xbf16>
    %1 = arith.extf %0 : vector<4x8xbf16> to vector<4x8xf32>
    %c0_1 = arith.constant 0 : index
    %c0_2 = arith.constant 0 : index
    %2 = vector.load %arg1[%c0_1, %c0_2] : memref<32x4xbf16, #tpu.memory_space<vmem>>, vector<32x4xbf16>
    %3 = arith.extf %2 : vector<32x4xbf16> to vector<32x4xf32>
    %4 = vector.extract_strided_slice %3 {offsets = [0, 0], sizes = [32, 1], strides = [1, 1]} : vector<32x4xf32> to vector<32x1xf32>
    %5 = vector.extract_strided_slice %1 {offsets = [0, 0], sizes = [1, 8], strides = [1, 1]} : vector<4x8xf32> to vector<1x8xf32>
    %6 = vector.broadcast %4 : vector<32x1xf32> to vector<32x8xf32>
    %7 = vector.broadcast %5 : vector<1x8xf32> to vector<32x8xf32>
    %8 = arith.mulf %6, %7 : vector<32x8xf32>
    %9 = vector.extract_strided_slice %3 {offsets = [0, 1], sizes = [32, 1], strides = [1, 1]} : vector<32x4xf32> to vector<32x1xf32>
    %10 = vector.extract_strided_slice %1 {offsets = [1, 0], sizes = [1, 8], strides = [1, 1]} : vector<4x8xf32> to vector<1x8xf32>
    %11 = vector.broadcast %9 : vector<32x1xf32> to vector<32x8xf32>
    %12 = vector.broadcast %10 : vector<1x8xf32> to vector<32x8xf32>
    %13 = arith.mulf %11, %12 : vector<32x8xf32>
    %14 = arith.addf %8, %13 : vector<32x8xf32>
    %15 = vector.extract_strided_slice %3 {offsets = [0, 2], sizes = [32, 1], strides = [1, 1]} : vector<32x4xf32> to vector<32x1xf32>
    %16 = vector.extract_strided_slice %1 {offsets = [2, 0], sizes = [1, 8], strides = [1, 1]} : vector<4x8xf32> to vector<1x8xf32>
    %17 = vector.broadcast %15 : vector<32x1xf32> to vector<32x8xf32>
    %18 = vector.broadcast %16 : vector<1x8xf32> to vector<32x8xf32>
    %19 = arith.mulf %17, %18 : vector<32x8xf32>
    %20 = arith.addf %14, %19 : vector<32x8xf32>
    %21 = vector.extract_strided_slice %3 {offsets = [0, 3], sizes = [32, 1], strides = [1, 1]} : vector<32x4xf32> to vector<32x1xf32>
    %22 = vector.extract_strided_slice %1 {offsets = [3, 0], sizes = [1, 8], strides = [1, 1]} : vector<4x8xf32> to vector<1x8xf32>
    %23 = vector.broadcast %21 : vector<32x1xf32> to vector<32x8xf32>
    %24 = vector.broadcast %22 : vector<1x8xf32> to vector<32x8xf32>
    %25 = arith.mulf %23, %24 : vector<32x8xf32>
    %26 = arith.addf %20, %25 : vector<32x8xf32>
    %c0_3 = arith.constant 0 : index
    %c0_4 = arith.constant 0 : index
    %27 = vector.load %arg2[%c0_3, %c0_4] : memref<32x1xf32, #tpu.memory_space<vmem>>, vector<32x1xf32>
    %28 = vector.broadcast %27 : vector<32x1xf32> to vector<32x8xf32>
    %29 = arith.addf %26, %28 : vector<32x8xf32>
    %cst = arith.constant 0.000000e+00 : f32
    %30 = vector.broadcast %cst : f32 to vector<32x8xf32>
    %31 = arith.maximumf %29, %30 : vector<32x8xf32>
    %c0_5 = arith.constant 0 : index
    %c0_6 = arith.constant 0 : index
    %32 = vector.load %arg3[%c0_5, %c0_6] : memref<32x32xbf16, #tpu.memory_space<vmem>>, vector<32x32xbf16>
    %33 = arith.truncf %31 : vector<32x8xf32> to vector<32x8xbf16>
    %cst_7 = arith.constant dense<0.000000e+00> : vector<32x8xf32>
    %34 = tpu.matmul %32, %33, %cst_7 {dimension_numbers = #tpu.dot_dimension_numbers<[1], [0], [0], [1], [0, 0, 1, 1], [], []>} : vector<32x32xbf16>, vector<32x8xbf16>, vector<32x8xf32> -> vector<32x8xf32>
    %c0_8 = arith.constant 0 : index
    %c0_9 = arith.constant 0 : index
    %35 = vector.load %arg4[%c0_8, %c0_9] : memref<32x1xf32, #tpu.memory_space<vmem>>, vector<32x1xf32>
    %36 = vector.broadcast %35 : vector<32x1xf32> to vector<32x8xf32>
    %37 = arith.addf %34, %36 : vector<32x8xf32>
    %cst_10 = arith.constant 0.000000e+00 : f32
    %38 = vector.broadcast %cst_10 : f32 to vector<32x8xf32>
    %39 = arith.maximumf %37, %38 : vector<32x8xf32>
    %c0_11 = arith.constant 0 : index
    %c0_12 = arith.constant 0 : index
    %40 = vector.load %arg5[%c0_11, %c0_12] : memref<8x32xbf16, #tpu.memory_space<vmem>>, vector<8x32xbf16>
    %41 = arith.truncf %39 : vector<32x8xf32> to vector<32x8xbf16>
    %cst_13 = arith.constant dense<0.000000e+00> : vector<8x8xf32>
    %42 = tpu.matmul %40, %41, %cst_13 {dimension_numbers = #tpu.dot_dimension_numbers<[1], [0], [0], [1], [0, 0, 1, 1], [], []>} : vector<8x32xbf16>, vector<32x8xbf16>, vector<8x8xf32> -> vector<8x8xf32>
    %c0_14 = arith.constant 0 : index
    %c0_15 = arith.constant 0 : index
    %43 = vector.load %arg6[%c0_14, %c0_15] : memref<8x1xf32, #tpu.memory_space<vmem>>, vector<8x1xf32>
    %44 = vector.broadcast %43 : vector<8x1xf32> to vector<8x8xf32>
    %45 = arith.addf %42, %44 : vector<8x8xf32>
    %c0_16 = arith.constant 0 : index
    %c0_17 = arith.constant 0 : index
    %46 = vector.load %arg7[%c0_16, %c0_17] : memref<8x8xf32, #tpu.memory_space<vmem>>, vector<8x8xf32>
    tpu.vector_store %arg7[%c0_16, %c0_17], %45 {strides = array<i32>} : memref<8x8xf32, #tpu.memory_space<vmem>>, vector<8x8xf32>,
    return
  }
}

</mosaic_0001>

<llo_original>
// kernel: parameter_mlp_forward.1
$region0: #{parameter_mlp_forward.1}
  #allocation0 [shape = 'u32[]', space=smem, size = 0x4, offset = 0x4, fixed_abs, tag = 'smem constant byte address 0x4 - core index']
  #allocation1 [shape = 'u32[72,128]{1,0:T(1,128)}', space=vmem, size = 0x9000, scoped, tag = 'internal scratch']
  %s0 = inlined_call_operand.vmem [shape: bf16[4,8], index: 0, kind: input, shape index: {}]
  %s1 = inlined_call_operand.vmem [shape: bf16[32,4], index: 1, kind: input, shape index: {}]
  %s2 = inlined_call_operand.vmem [shape: f32[32,1], index: 2, kind: input, shape index: {}]
  %s3 = inlined_call_operand.vmem [shape: bf16[32,32], index: 3, kind: input, shape index: {}]
  %s4 = inlined_call_operand.vmem [shape: f32[32,1], index: 4, kind: input, shape index: {}]
  %s5 = inlined_call_operand.vmem [shape: bf16[8,32], index: 5, kind: input, shape index: {}]
  %s6 = inlined_call_operand.vmem [shape: f32[8,1], index: 6, kind: input, shape index: {}]
  %s7 = inlined_call_operand.vmem [shape: f32[8,8], index: 7, kind: output, shape index: {}]
  %s8 = sld [smem:[#allocation0]]
  $region38: #{parameter_mlp_forward.1} parent=0
    _
  %s10 = ssub.s32 1, %s8
  %s11 = scalar_select 0, %s10, %s8
  // Predicated region
  $region2: #{parameter_mlp_forward.1} parent=0 // pred_check
    _
  $region3: #{parameter_mlp_forward.1} parent=0 // pred_check_branch
    %13 = sbr.rel (0) target = $region5
  $region4: #{parameter_mlp_forward.1} parent=0 // pred_region
    _
  $region5: #{parameter_mlp_forward.1} parent=0 // pred_fallthru
    _
  // Predicated region
  $region6: #{parameter_mlp_forward.1} parent=0 // pred_check
    _
  $region7: #{parameter_mlp_forward.1} parent=0 // pred_check_branch
    %15 = sbr.rel (0) target = $region9
  $region8: #{parameter_mlp_forward.1} parent=0 // pred_region
    _
  $region9: #{parameter_mlp_forward.1} parent=0 // pred_fallthru
    _
  // Predicated region
  $region10: #{parameter_mlp_forward.1} parent=0 // pred_check
    _
  $region11: #{parameter_mlp_forward.1} parent=0 // pred_check_branch
    %17 = sbr.rel (0) target = $region13
  $region12: #{parameter_mlp_forward.1} parent=0 // pred_region
    _
  $region13: #{parameter_mlp_forward.1} parent=0 // pred_fallthru
    _
  // Predicated region
  $region14: #{parameter_mlp_forward.1} parent=0 // pred_check
    _
  $region15: #{parameter_mlp_forward.1} parent=0 // pred_check_branch
    %19 = sbr.rel (0) target = $region17
  $region16: #{parameter_mlp_forward.1} parent=0 // pred_region
    _
  $region17: #{parameter_mlp_forward.1} parent=0 // pred_fallthru
    _
  // Predicated region
  $region18: #{parameter_mlp_forward.1} parent=0 // pred_check
    _
  $region19: #{parameter_mlp_forward.1} parent=0 // pred_check_branch
    %21 = sbr.rel (0) target = $region21
  $region20: #{parameter_mlp_forward.1} parent=0 // pred_region
    _
  $region21: #{parameter_mlp_forward.1} parent=0 // pred_fallthru
    _
  // Predicated region
  $region22: #{parameter_mlp_forward.1} parent=0 // pred_check
    _
  $region23: #{parameter_mlp_forward.1} parent=0 // pred_check_branch
    %23 = sbr.rel (0) target = $region25
  $region24: #{parameter_mlp_forward.1} parent=0 // pred_region
    _
  $region25: #{parameter_mlp_forward.1} parent=0 // pred_fallthru
    _
  // Predicated region
  $region26: #{parameter_mlp_forward.1} parent=0 // pred_check
    _
  $region27: #{parameter_mlp_forward.1} parent=0 // pred_check_branch
    %25 = sbr.rel (0) target = $region29
  $region28: #{parameter_mlp_forward.1} parent=0 // pred_region
    _
  $region29: #{parameter_mlp_forward.1} parent=0 // pred_fallthru
    _
  %v27 = vld [vmem:[%s0] sm:$0x3]
  %v28 = vunpack.c.l.bf16 %v27
  %v29 = vld [vmem:[%s1] sm:$0xf]
  %v30 = vld [vmem:[%s1 + $0x4] sm:$0xf]
  %v31 = vld [vmem:[%s1 + $0x8] sm:$0xf]
  %v32 = vld [vmem:[%s1 + $0xc] sm:$0xf]
  %v33 = vunpack.c.l.bf16 %v29
  %v34 = vunpack.c.l.bf16 %v30
  %v35 = vunpack.c.l.bf16 %v31
  %v36 = vunpack.c.l.bf16 %v32
  %38 = vset.pattern.permute.xlu0 0
  %39 = vperm.xlu0 %38, %v33
  %v40 = vpop.permute.xlu0 %39
  %43 = vset.pattern.permute.xlu0 0
  %44 = vperm.xlu0 %43, %v34
  %v45 = vpop.permute.xlu0 %44
  %48 = vset.pattern.permute.xlu0 0
  %49 = vperm.xlu0 %48, %v35
  %v50 = vpop.permute.xlu0 %49
  %53 = vset.pattern.permute.xlu0 0
  %54 = vperm.xlu0 %53, %v36
  %v55 = vpop.permute.xlu0 %54
  %v57 = vperm.slane %v28, 0
  %v58 = vmul.f32 %v40, %v57
  %v59 = vmul.f32 %v45, %v57
  %v60 = vmul.f32 %v50, %v57
  %v61 = vmul.f32 %v55, %v57
  %62 = vset.pattern.permute.xlu0 1
  %63 = vperm.xlu0 %62, %v33
  %v64 = vpop.permute.xlu0 %63
  %66 = vset.pattern.permute.xlu0 1
  %67 = vperm.xlu0 %66, %v34
  %v68 = vpop.permute.xlu0 %67
  %70 = vset.pattern.permute.xlu0 1
  %71 = vperm.xlu0 %70, %v35
  %v72 = vpop.permute.xlu0 %71
  %74 = vset.pattern.permute.xlu0 1
  %75 = vperm.xlu0 %74, %v36
  %v76 = vpop.permute.xlu0 %75
  %v78 = vperm.slane %v28, 1
  %v79 = vmul.f32 %v64, %v78
  %v80 = vmul.f32 %v68, %v78
  %v81 = vmul.f32 %v72, %v78
  %v82 = vmul.f32 %v76, %v78
  %v83 = vadd.f32 %v58, %v79
  %v84 = vadd.f32 %v59, %v80
  %v85 = vadd.f32 %v60, %v81
  %v86 = vadd.f32 %v61, %v82
  %87 = vset.pattern.permute.xlu0 2
  %88 = vperm.xlu0 %87, %v33
  %v89 = vpop.permute.xlu0 %88
  %91 = vset.pattern.permute.xlu0 2
  %92 = vperm.xlu0 %91, %v34
  %v93 = vpop.permute.xlu0 %92
  %95 = vset.pattern.permute.xlu0 2
  %96 = vperm.xlu0 %95, %v35
  %v97 = vpop.permute.xlu0 %96
  %99 = vset.pattern.permute.xlu0 2
  %100 = vperm.xlu0 %99, %v36
  %v101 = vpop.permute.xlu0 %100
  %v103 = vperm.slane %v28, 2
  %v104 = vmul.f32 %v89, %v103
  %v105 = vmul.f32 %v93, %v103
  %v106 = vmul.f32 %v97, %v103
  %v107 = vmul.f32 %v101, %v103
  %v108 = vadd.f32 %v83, %v104
  %v109 = vadd.f32 %v84, %v105
  %v110 = vadd.f32 %v85, %v106
  %v111 = vadd.f32 %v86, %v107
  %112 = vset.pattern.permute.xlu0 3
  %113 = vperm.xlu0 %112, %v33
  %v114 = vpop.permute.xlu0 %113
  %116 = vset.pattern.permute.xlu0 3
  %117 = vperm.xlu0 %116, %v34
  %v118 = vpop.permute.xlu0 %117
  %120 = vset.pattern.permute.xlu0 3
  %121 = vperm.xlu0 %120, %v35
  %v122 = vpop.permute.xlu0 %121
  %124 = vset.pattern.permute.xlu0 3
  %125 = vperm.xlu0 %124, %v36
  %v126 = vpop.permute.xlu0 %125
  %v128 = vperm.slane %v28, 3
  %v129 = vmul.f32 %v114, %v128
  %v130 = vmul.f32 %v118, %v128
  %v131 = vmul.f32 %v122, %v128
  %v132 = vmul.f32 %v126, %v128
  %v133 = vadd.f32 %v108, %v129
  %v134 = vadd.f32 %v109, %v130
  %v135 = vadd.f32 %v110, %v131
  %v136 = vadd.f32 %v111, %v132
  %v137 = vld [vmem:[%s2] sm:$0xff]
  %v138 = vld [vmem:[%s2 + $0x8] sm:$0xff]
  %v139 = vld [vmem:[%s2 + $0x10] sm:$0xff]
  %v140 = vld [vmem:[%s2 + $0x18] sm:$0xff]
  %142 = vset.pattern.permute.xlu0 0
  %143 = vperm.xlu0 %142, %v137
  %v144 = vpop.permute.xlu0 %143
  %147 = vset.pattern.permute.xlu0 0
  %148 = vperm.xlu0 %147, %v138
  %v149 = vpop.permute.xlu0 %148
  %152 = vset.pattern.permute.xlu0 0
  %153 = vperm.xlu0 %152, %v139
  %v154 = vpop.permute.xlu0 %153
  %157 = vset.pattern.permute.xlu0 0
  %158 = vperm.xlu0 %157, %v140
  %v159 = vpop.permute.xlu0 %158
  %v161 = vadd.f32 %v133, %v144
  %v162 = vadd.f32 %v134, %v149
  %v163 = vadd.f32 %v135, %v154
  %v164 = vadd.f32 %v136, %v159
  %v165 = vmax.f32 %v161, 0.0
  %v166 = vmax.f32 %v162, 0.0
  %v167 = vmax.f32 %v163, 0.0
  %v168 = vmax.f32 %v164, 0.0
  %v169 = vld [vmem:[%s3] sm:$0xf]
  %v170 = vld [vmem:[%s3 + $0x4] sm:$0xf]
  %v171 = vld [vmem:[%s3 + $0x8] sm:$0xf]
  %v172 = vld [vmem:[%s3 + $0xc] sm:$0xf]
  %v173 = vpack.c.bf16 %v166, %v165
  %v174 = vpack.c.bf16 %v168, %v167
  %v175 = vld [vmem:[%s4] sm:$0xff]
  %v176 = vld [vmem:[%s4 + $0x8] sm:$0xff]
  %v177 = vld [vmem:[%s4 + $0x10] sm:$0xff]
  %v178 = vld [vmem:[%s4 + $0x18] sm:$0xff]
  %180 = vset.pattern.permute.xlu0 0
  %181 = vperm.xlu0 %180, %v175
  %v182 = vpop.permute.xlu0 %181
  %185 = vset.pattern.permute.xlu0 0
  %186 = vperm.xlu0 %185, %v176
  %v187 = vpop.permute.xlu0 %186
  %190 = vset.pattern.permute.xlu0 0
  %191 = vperm.xlu0 %190, %v177
  %v192 = vpop.permute.xlu0 %191
  %195 = vset.pattern.permute.xlu0 0
  %196 = vperm.xlu0 %195, %v178
  %v197 = vpop.permute.xlu0 %196
  %v203 = vunpack.c.l.b16 %v169
  %v204 = vunpack.c.l.b16 %v170
  %v205 = vunpack.c.l.b16 %v171
  %v206 = vunpack.c.l.b16 %v172
  %v207 = vpack.c.b16 %v204, %v203
  %v208 = vpack.c.b16 %v206, %v205
  %vm209 = vcmask 261120
  %v211 = vsel %vm209, %v207, 0
  %v214 = vsel %vm209, %v208, 0
  %216 = vmatpush.bf16.msra.mxu0 0
  %217 = vmatpush.bf16.msra.mxu0 0
  %218 = vmatpush.bf16.msra.mxu0 0
  %219 = vmatpush.bf16.msra.mxu0 0
  %220 = vmatpush.bf16.msra.mxu0 0
  %221 = vmatpush.bf16.msra.mxu0 0
  %222 = vmatpush.bf16.msra.mxu0 %v174
  %223 = vmatpush.bf16.msra.mxu0 %v173
  %224 = vmatmul.bf16.gmra.mxu0 %v211
  %v225 = vpop.f32.mrf.mxu0
  %v226 = vadd.f32 %v182, %v225
  %v227 = vpop.f32.mrf.mxu0
  %v228 = vadd.f32 %v187, %v227
  %229 = vmatmul.bf16.gmra.mxu0 %v214
  %v230 = vpop.f32.mrf.mxu0
  %v231 = vadd.f32 %v192, %v230
  %v232 = vpop.f32.mrf.mxu0
  %v233 = vadd.f32 %v197, %v232
  %234 = vdwg.mxu0
  %v235 = vmax.f32 %v226, 0.0
  %v236 = vmax.f32 %v228, 0.0
  %v237 = vmax.f32 %v231, 0.0
  %v238 = vmax.f32 %v233, 0.0
  %v239 = vld [vmem:[%s5] sm:$0xf]
  %v240 = vpack.c.bf16 %v236, %v235
  %v241 = vpack.c.bf16 %v238, %v237
  %v242 = vld [vmem:[%s6] sm:$0xff]
  %244 = vset.pattern.permute.xlu0 0
  %245 = vperm.xlu0 %244, %v242
  %v246 = vpop.permute.xlu0 %245
  %v249 = vsel %vm209, %v239, 0
  %251 = vmatpush.bf16.msra.mxu0 0
  %252 = vmatpush.bf16.msra.mxu0 0
  %253 = vmatpush.bf16.msra.mxu0 0
  %254 = vmatpush.bf16.msra.mxu0 0
  %255 = vmatpush.bf16.msra.mxu0 0
  %256 = vmatpush.bf16.msra.mxu0 0
  %257 = vmatpush.bf16.msra.mxu0 %v241
  %258 = vmatpush.bf16.msra.mxu0 %v240
  %259 = vmatmul.bf16.gmra.mxu0 %v249
  %v260 = vpop.f32.mrf.mxu0
  %v261 = vadd.f32 %v246, %v260
  %v262 = vpop.f32.mrf.mxu0
  %263 = vdwg.mxu0
  %vm264 = vcmask 64512
  %265 = vst.msk [vmem:[%s7] sm:$0xff] %vm264, %v261
  // Predicated region
  $region30: #{parameter_mlp_forward.1} parent=0 // pred_check
    _
  $region31: #{parameter_mlp_forward.1} parent=0 // pred_check_branch
    %267 = sbr.rel (0) target = $region33
  $region32: #{parameter_mlp_forward.1} parent=0 // pred_region
    _
  $region33: #{parameter_mlp_forward.1} parent=0 // pred_fallthru
    _
  // Predicated region
  $region34: #{parameter_mlp_forward.1} parent=0 // pred_check
    _
  $region35: #{parameter_mlp_forward.1} parent=0 // pred_check_branch
    %269 = sbr.rel (0) target = $region37
  $region36: #{parameter_mlp_forward.1} parent=0 // pred_region
    _
  $region37: #{parameter_mlp_forward.1} parent=0 // pred_fallthru
    _

</llo_original>
